<compile_context>
chip_gen: v7x
topology: tpu7x:2x2x1
jax: 0.10.0
libtpu: 0.0.40
codegen_flags: <defaults>
</compile_context>

<pallas_src>
import jax
import jax.numpy as jnp
from jax import lax
from jax.experimental import pallas as pl
from jax.experimental.pallas import tpu as pltpu
import numpy as np


def _round_up(a, m):
    return -(-a // m) * m


def _vmem_capacity_bytes():
    try:
        info = pltpu.get_tpu_info()
        cap = getattr(info, "vmem_capacity_bytes", None)
        if cap:
            return int(cap)
    except Exception:
        pass
    return 64 * 1024 * 1024  # conservative: v7x per-TensorCore VMEM


def _make_kernel(B, C, H, W, pad, dense_rows):
    """Kernel over one block of B samples.

    shift_ref : SMEM (2*N,) int32 scalar-prefetch, laid out [sx0, sy0, sx1, sy1, ...]
    x_ref     : VMEM (B, C, H, W) input block
    o_ref     : VMEM (B, C, H, W)  or  (B, dense_rows, 128) output block
    """

    def kernel(shift_ref, x_ref, o_ref):
        base = pl.program_id(0) * B

        def body(b, carry):
            idx = base + b
            dx = shift_ref[2 * idx] - pad        # width  shift in [-pad, pad]
            dy = shift_ref[2 * idx + 1] - pad    # height shift in [-pad, pad]

            # Integer shifts => grid_sample degenerates to a clamped shifted crop.
            # One-hot selection matrices (replicate padding folded in), built entirely
            # in-kernel from the SMEM scalars: no Wy/Wx HBM traffic at all.
            ii = lax.broadcasted_iota(jnp.int32, (C, H, H), 1)
            rr = lax.broadcasted_iota(jnp.int32, (C, H, H), 2)
            wy = (rr == jnp.clip(ii + dy, 0, H - 1)).astype(jnp.float32)   # (C, H, H)
            jj = lax.broadcasted_iota(jnp.int32, (C, W, W), 1)
            qq = lax.broadcasted_iota(jnp.int32, (C, W, W), 2)
            wx = (qq == jnp.clip(jj + dx, 0, W - 1)).astype(jnp.float32)   # (C, W, W)

            xb = x_ref[b].astype(jnp.float32)                               # (C, H, W)
            # Column interp, all channels batched: s[c,r,j] = sum_q x[c,r,q] * wx[c,j,q]
            s = jnp.einsum('crq,cjq->crj', xb, wx,
                           preferred_element_type=jnp.float32)
            # Row interp, all channels batched:    o[c,i,j] = sum_r wy[c,i,r] * s[c,r,j]
            o = jnp.einsum('cir,crj->cij', wy, s,
                           preferred_element_type=jnp.float32)
            o = o.astype(o_ref.dtype)

            if dense_rows is None:
                o_ref[b] = o                             # one dense (C, H, W) slab store
            else:
                o_ref[b] = o.reshape(dense_rows, 128)    # lane-dense slab store
            return carry

        lax.fori_loop(0, B, body, 0)

    return kernel


def random_shifts_aug(x, pad, key):
    """RandomShiftsAug forward.  Returns (augmented images, integer shifts (n, 2))."""
    n, c, h, w = x.shape
    assert h == w
    dtype = x.dtype
    itemsize = jnp.dtype(dtype).itemsize

    shift_int = jax.random.randint(key, (n, 2), 0, 2 * pad + 1, dtype=jnp.int32)
    shift_flat = shift_int.reshape(-1)        # SMEM scalar-prefetch operand

    # ---- VMEM accounting in *padded* tile bytes ((8, 128) tiling). ----
    cap = _vmem_capacity_bytes()
    vmem_limit = min(int(0.75 * cap), 96 * 1024 * 1024)   # <=48 MiB on v7x, <=96 MiB on 128-MiB parts
    budget = int(0.70 * vmem_limit)                       # headroom for compiler scratch / semaphores

    f32 = 4
    in_tile = c * _round_up(h, 8) * _round_up(w, 128) * itemsize           # per-sample input block
    compute_bytes = (c * _round_up(h, 8) * _round_up(h, 128) * f32         # wy
                     + c * _round_up(w, 8) * _round_up(w, 128) * f32       # wx
                     + 3 * c * _round_up(h, 8) * _round_up(w, 128) * f32)  # xb / s / o (one sample live)

    chw = c * h * w
    dense_rows = chw // 128 if chw % 128 == 0 else None

    def _choose_B(out_tile):
        per_sample = 2 * (in_tile + out_tile)             # double-buffered in + out blocks
        divs = [d for d in range(1, n + 1)
                if n % d == 0 and d * per_sample + compute_bytes <= budget]
        if not divs:
            return 1
        # Prefer enough grid steps for pipelining, and an even grid for v7x's 2 TCs,
        # then the largest sample block to amortize the ~0.35us per-step overhead.
        for ok in (lambda d: (n // d) >= 4 and (n // d) % 2 == 0,
                   lambda d: (n // d) >= 2 and (n // d) % 2 == 0,
                   lambda d: (n // d) >= 2,
                   lambda d: True):
            cand = [d for d in divs if ok(d)]
            if cand:
                return max(cand)
        return 1

    def _run(dense):
        if dense:
            out_tile = _round_up(dense_rows, 8) * 128 * itemsize
        else:
            out_tile = in_tile
        B = _choose_B(out_tile)
        grid = n // B

        if dense:
            out_shape = jax.ShapeDtypeStruct((n, dense_rows, 128), dtype)
            out_spec = pl.BlockSpec((B, dense_rows, 128), lambda i, s: (i, 0, 0))
        else:
            out_shape = jax.ShapeDtypeStruct((n, c, h, w), dtype)
            out_spec = pl.BlockSpec((B, c, h, w), lambda i, s: (i, 0, 0, 0))

        out = pl.pallas_call(
            _make_kernel(B, c, h, w, pad, dense_rows if dense else None),
            out_shape=out_shape,
            grid_spec=pltpu.PrefetchScalarGridSpec(
                num_scalar_prefetch=1,
                grid=(grid,),
                in_specs=[pl.BlockSpec((B, c, h, w), lambda i, s: (i, 0, 0, 0))],
                out_specs=out_spec,
            ),
            compiler_params=pltpu.CompilerParams(
                dimension_semantics=("parallel",),
                vmem_limit_bytes=vmem_limit),
        )(shift_flat, x)
        return out.reshape(n, c, h, w)     # free reshape (row-major contiguous)

    if dense_rows is not None:
        # Lane-dense output slab (last dim = 128): unmasked vst + efficient output DMA.
        try:
            return jax.block_until_ready(_run(dense=True)), shift_int
        except Exception:
            # TODO(synk): this Mosaic build can't lower the sublane->lane relayout
            # reshape; fall back to the natural (lane-padded) output layout.
            pass
    return jax.block_until_ready(_run(dense=False)), shift_int


if __name__ == "__main__":
    PAD = 4
    key = jax.random.PRNGKey(0)
    kx, ks = jax.random.split(key)
    x = jax.random.normal(kx, (4, 4, 16, 16), dtype=jnp.float32)

    out, shift_int = random_shifts_aug(x, pad=PAD, key=ks)
    out = jax.block_until_ready(out)

    # Reference: integer crop of the replicate-padded image (what the grid encodes
    # for integer shifts — identical to grid_sample(align_corners=False, zeros)).
    xp = np.asarray(jnp.pad(x, ((0, 0), (0, 0), (PAD, PAD), (PAD, PAD)), mode="edge"))
    sh = np.asarray(shift_int)
    h = x.shape[2]
    ref = np.stack([
        xp[i, :, sh[i, 1]:sh[i, 1] + h, sh[i, 0]:sh[i, 0] + h]
        for i in range(x.shape[0])
    ])
    assert np.allclose(np.asarray(out), ref, atol=1e-4), "kernel output mismatch"
    print("KERNEL_OK")
</pallas_src>

<mosaic_0001>
module attributes {stable_mosaic.version = 11 : i64} {
  func.func @kernel(%arg0: i32, %arg1: memref<8xi32, #tpu.memory_space<smem>>, %arg2: memref<1x4x16x16xf32, #tpu.memory_space<vmem>>, %arg3: memref<1x8x128xf32, #tpu.memory_space<vmem>>) attributes {dimension_semantics = [#tpu.dimension_semantics<parallel>], iteration_bounds = array<i64: 4>, scalar_prefetch = 1 : i64, scratch_operands = 0 : i64, tpu.core_type = #tpu.core_type<tc>, window_params = [{transform_indices = @transform_0, window_bounds = array<i64: 1, 4, 16, 16>}, {transform_indices = @transform_1, window_bounds = array<i64: 1, 8, 128>}]} {
    %c1_i32 = arith.constant 1 : i32
    %0 = arith.muli %arg0, %c1_i32 : i32
    %c0_i32 = arith.constant 0 : i32
    %1 = arith.addi %0, %c0_i32 : i32
    %c2_i32 = arith.constant 2 : i32
    %2 = arith.muli %c2_i32, %1 : i32
    %3 = arith.index_cast %2 : i32 to index
    %4 = memref.load %arg1[%3] : memref<8xi32, #tpu.memory_space<smem>>
    %c4_i32 = arith.constant 4 : i32
    %5 = arith.subi %4, %c4_i32 : i32
    %c2_i32_0 = arith.constant 2 : i32
    %6 = arith.muli %c2_i32_0, %1 : i32
    %c1_i32_1 = arith.constant 1 : i32
    %7 = arith.addi %6, %c1_i32_1 : i32
    %8 = arith.index_cast %7 : i32 to index
    %9 = memref.load %arg1[%8] : memref<8xi32, #tpu.memory_space<smem>>
    %c4_i32_2 = arith.constant 4 : i32
    %10 = arith.subi %9, %c4_i32_2 : i32
    %11 = tpu.iota {dimensions = array<i32: 1>} : vector<4x16x16xi32>
    %12 = tpu.iota {dimensions = array<i32: 2>} : vector<4x16x16xi32>
    %13 = vector.broadcast %10 : i32 to vector<4x16x16xi32>
    %14 = arith.addi %11, %13 : vector<4x16x16xi32>
    %c0_i32_3 = arith.constant 0 : i32
    %c15_i32 = arith.constant 15 : i32
    %15 = vector.broadcast %c0_i32_3 : i32 to vector<4x16x16xi32>
    %16 = arith.maxsi %15, %14 : vector<4x16x16xi32>
    %17 = vector.broadcast %c15_i32 : i32 to vector<4x16x16xi32>
    %18 = arith.minsi %17, %16 : vector<4x16x16xi32>
    %19 = arith.cmpi eq, %12, %18 : vector<4x16x16xi32>
    %20 = arith.extui %19 : vector<4x16x16xi1> to vector<4x16x16xi32>
    %21 = arith.sitofp %20 : vector<4x16x16xi32> to vector<4x16x16xf32>
    %22 = tpu.iota {dimensions = array<i32: 1>} : vector<4x16x16xi32>
    %23 = tpu.iota {dimensions = array<i32: 2>} : vector<4x16x16xi32>
    %24 = vector.broadcast %5 : i32 to vector<4x16x16xi32>
    %25 = arith.addi %22, %24 : vector<4x16x16xi32>
    %c0_i32_4 = arith.constant 0 : i32
    %c15_i32_5 = arith.constant 15 : i32
    %26 = vector.broadcast %c0_i32_4 : i32 to vector<4x16x16xi32>
    %27 = arith.maxsi %26, %25 : vector<4x16x16xi32>
    %28 = vector.broadcast %c15_i32_5 : i32 to vector<4x16x16xi32>
    %29 = arith.minsi %28, %27 : vector<4x16x16xi32>
    %30 = arith.cmpi eq, %23, %29 : vector<4x16x16xi32>
    %31 = arith.extui %30 : vector<4x16x16xi1> to vector<4x16x16xi32>
    %32 = arith.sitofp %31 : vector<4x16x16xi32> to vector<4x16x16xf32>
    %33 = arith.index_cast %c0_i32 : i32 to index
    %c0 = arith.constant 0 : index
    %c0_6 = arith.constant 0 : index
    %c0_7 = arith.constant 0 : index
    %34 = vector.load %arg2[%33, %c0, %c0_6, %c0_7] : memref<1x4x16x16xf32, #tpu.memory_space<vmem>>, vector<1x4x16x16xf32>
    %35 = vector.shape_cast %34 : vector<1x4x16x16xf32> to vector<4x16x16xf32>
    "tpu.trace_start"() <{level = 10 : i32, message = "crq,cjq->crj"}> : () -> ()
    %cst = arith.constant dense<0.000000e+00> : vector<4x16x16xf32>
    %36 = tpu.matmul %35, %32, %cst {dimension_numbers = #tpu.dot_dimension_numbers<[2], [2], [1], [1], [0, 0, 0, 1, 1, 1], [0], [0]>} : vector<4x16x16xf32>, vector<4x16x16xf32>, vector<4x16x16xf32> -> vector<4x16x16xf32>
    "tpu.trace_stop"() : () -> ()
    "tpu.trace_start"() <{level = 10 : i32, message = "cir,crj->cij"}> : () -> ()
    %cst_8 = arith.constant dense<0.000000e+00> : vector<4x16x16xf32>
    %37 = tpu.matmul %21, %36, %cst_8 {dimension_numbers = #tpu.dot_dimension_numbers<[2], [1], [1], [2], [0, 0, 0, 1, 1, 2], [0], [0]>} : vector<4x16x16xf32>, vector<4x16x16xf32>, vector<4x16x16xf32> -> vector<4x16x16xf32>
    "tpu.trace_stop"() : () -> ()
    %38 = vector.shape_cast %37 : vector<4x16x16xf32> to vector<8x128xf32>
    %39 = arith.index_cast %c0_i32 : i32 to index
    %c0_9 = arith.constant 0 : index
    %c0_10 = arith.constant 0 : index
    %40 = vector.load %arg3[%39, %c0_9, %c0_10] : memref<1x8x128xf32, #tpu.memory_space<vmem>>, vector<1x8x128xf32>
    %41 = vector.shape_cast %40 : vector<1x8x128xf32> to vector<8x128xf32>
    %42 = vector.shape_cast %38 : vector<8x128xf32> to vector<1x8x128xf32>
    tpu.vector_store %arg3[%39, %c0_9, %c0_10], %42 {strides = array<i32>} : memref<1x8x128xf32, #tpu.memory_space<vmem>>, vector<1x8x128xf32>,
    %c1_i32_11 = arith.constant 1 : i32
    return
  }
  func.func @transform_0(%arg0: i32, %arg1: memref<8xi32, #tpu.memory_space<smem>>) -> (i32, i32, i32, i32) {
    %c0_i32 = arith.constant 0 : i32
    %c0_i32_0 = arith.constant 0 : i32
    %c0_i32_1 = arith.constant 0 : i32
    %c0_i32_2 = arith.constant 0 : i32
    return %arg0, %c0_i32, %c0_i32_0, %c0_i32_1 : i32, i32, i32, i32
  }
  func.func @transform_1(%arg0: i32, %arg1: memref<8xi32, #tpu.memory_space<smem>>) -> (i32, i32, i32) {
    %c0_i32 = arith.constant 0 : i32
    %c0_i32_0 = arith.constant 0 : i32
    %c0_i32_1 = arith.constant 0 : i32
    return %arg0, %c0_i32, %c0_i32_0 : i32, i32, i32
  }
}

module attributes {stable_mosaic.version = 11 : i64} {
  func.func @kernel(%arg0: i32, %arg1: memref<8xi32, #tpu.memory_space<smem>>, %arg2: memref<1x4x16x16xf32, #tpu.memory_space<vmem>>, %arg3: memref<1x4x16x16xf32, #tpu.memory_space<vmem>>) attributes {dimension_semantics = [#tpu.dimension_semantics<parallel>], iteration_bounds = array<i64: 4>, scalar_prefetch = 1 : i64, scratch_operands = 0 : i64, tpu.core_type = #tpu.core_type<tc>, window_params = [{transform_indices = @transform_0, window_bounds = array<i64: 1, 4, 16, 16>}, {transform_indices = @transform_1, window_bounds = array<i64: 1, 4, 16, 16>}]} {
    %c1_i32 = arith.constant 1 : i32
    %0 = arith.muli %arg0, %c1_i32 : i32
    %c0_i32 = arith.constant 0 : i32
    %1 = arith.addi %0, %c0_i32 : i32
    %c2_i32 = arith.constant 2 : i32
    %2 = arith.muli %c2_i32, %1 : i32
    %3 = arith.index_cast %2 : i32 to index
    %4 = memref.load %arg1[%3] : memref<8xi32, #tpu.memory_space<smem>>
    %c4_i32 = arith.constant 4 : i32
    %5 = arith.subi %4, %c4_i32 : i32
    %c2_i32_0 = arith.constant 2 : i32
    %6 = arith.muli %c2_i32_0, %1 : i32
    %c1_i32_1 = arith.constant 1 : i32
    %7 = arith.addi %6, %c1_i32_1 : i32
    %8 = arith.index_cast %7 : i32 to index
    %9 = memref.load %arg1[%8] : memref<8xi32, #tpu.memory_space<smem>>
    %c4_i32_2 = arith.constant 4 : i32
    %10 = arith.subi %9, %c4_i32_2 : i32
    %11 = tpu.iota {dimensions = array<i32: 1>} : vector<4x16x16xi32>
    %12 = tpu.iota {dimensions = array<i32: 2>} : vector<4x16x16xi32>
    %13 = vector.broadcast %10 : i32 to vector<4x16x16xi32>
    %14 = arith.addi %11, %13 : vector<4x16x16xi32>
    %c0_i32_3 = arith.constant 0 : i32
    %c15_i32 = arith.constant 15 : i32
    %15 = vector.broadcast %c0_i32_3 : i32 to vector<4x16x16xi32>
    %16 = arith.maxsi %15, %14 : vector<4x16x16xi32>
    %17 = vector.broadcast %c15_i32 : i32 to vector<4x16x16xi32>
    %18 = arith.minsi %17, %16 : vector<4x16x16xi32>
    %19 = arith.cmpi eq, %12, %18 : vector<4x16x16xi32>
    %20 = arith.extui %19 : vector<4x16x16xi1> to vector<4x16x16xi32>
    %21 = arith.sitofp %20 : vector<4x16x16xi32> to vector<4x16x16xf32>
    %22 = tpu.iota {dimensions = array<i32: 1>} : vector<4x16x16xi32>
    %23 = tpu.iota {dimensions = array<i32: 2>} : vector<4x16x16xi32>
    %24 = vector.broadcast %5 : i32 to vector<4x16x16xi32>
    %25 = arith.addi %22, %24 : vector<4x16x16xi32>
    %c0_i32_4 = arith.constant 0 : i32
    %c15_i32_5 = arith.constant 15 : i32
    %26 = vector.broadcast %c0_i32_4 : i32 to vector<4x16x16xi32>
    %27 = arith.maxsi %26, %25 : vector<4x16x16xi32>
    %28 = vector.broadcast %c15_i32_5 : i32 to vector<4x16x16xi32>
    %29 = arith.minsi %28, %27 : vector<4x16x16xi32>
    %30 = arith.cmpi eq, %23, %29 : vector<4x16x16xi32>
    %31 = arith.extui %30 : vector<4x16x16xi1> to vector<4x16x16xi32>
    %32 = arith.sitofp %31 : vector<4x16x16xi32> to vector<4x16x16xf32>
    %33 = arith.index_cast %c0_i32 : i32 to index
    %c0 = arith.constant 0 : index
    %c0_6 = arith.constant 0 : index
    %c0_7 = arith.constant 0 : index
    %34 = vector.load %arg2[%33, %c0, %c0_6, %c0_7] : memref<1x4x16x16xf32, #tpu.memory_space<vmem>>, vector<1x4x16x16xf32>
    %35 = vector.shape_cast %34 : vector<1x4x16x16xf32> to vector<4x16x16xf32>
    "tpu.trace_start"() <{level = 10 : i32, message = "crq,cjq->crj"}> : () -> ()
    %cst = arith.constant dense<0.000000e+00> : vector<4x16x16xf32>
    %36 = tpu.matmul %35, %32, %cst {dimension_numbers = #tpu.dot_dimension_numbers<[2], [2], [1], [1], [0, 0, 0, 1, 1, 1], [0], [0]>} : vector<4x16x16xf32>, vector<4x16x16xf32>, vector<4x16x16xf32> -> vector<4x16x16xf32>
    "tpu.trace_stop"() : () -> ()
    "tpu.trace_start"() <{level = 10 : i32, message = "cir,crj->cij"}> : () -> ()
    %cst_8 = arith.constant dense<0.000000e+00> : vector<4x16x16xf32>
    %37 = tpu.matmul %21, %36, %cst_8 {dimension_numbers = #tpu.dot_dimension_numbers<[2], [1], [1], [2], [0, 0, 0, 1, 1, 2], [0], [0]>} : vector<4x16x16xf32>, vector<4x16x16xf32>, vector<4x16x16xf32> -> vector<4x16x16xf32>
    "tpu.trace_stop"() : () -> ()
    %38 = arith.index_cast %c0_i32 : i32 to index
    %c0_9 = arith.constant 0 : index
    %c0_10 = arith.constant 0 : index
    %c0_11 = arith.constant 0 : index
    %39 = vector.load %arg3[%38, %c0_9, %c0_10, %c0_11] : memref<1x4x16x16xf32, #tpu.memory_space<vmem>>, vector<1x4x16x16xf32>
    %40 = vector.shape_cast %39 : vector<1x4x16x16xf32> to vector<4x16x16xf32>
    %41 = vector.shape_cast %37 : vector<4x16x16xf32> to vector<1x4x16x16xf32>
    tpu.vector_store %arg3[%38, %c0_9, %c0_10, %c0_11], %41 {strides = array<i32>} : memref<1x4x16x16xf32, #tpu.memory_space<vmem>>, vector<1x4x16x16xf32>,
    %c1_i32_12 = arith.constant 1 : i32
    return
  }
  func.func @transform_0(%arg0: i32, %arg1: memref<8xi32, #tpu.memory_space<smem>>) -> (i32, i32, i32, i32) {
    %c0_i32 = arith.constant 0 : i32
    %c0_i32_0 = arith.constant 0 : i32
    %c0_i32_1 = arith.constant 0 : i32
    %c0_i32_2 = arith.constant 0 : i32
    return %arg0, %c0_i32, %c0_i32_0, %c0_i32_1 : i32, i32, i32, i32
  }
  func.func @transform_1(%arg0: i32, %arg1: memref<8xi32, #tpu.memory_space<smem>>) -> (i32, i32, i32, i32) {
    %c0_i32 = arith.constant 0 : i32
    %c0_i32_0 = arith.constant 0 : i32
    %c0_i32_1 = arith.constant 0 : i32
    %c0_i32_2 = arith.constant 0 : i32
    return %arg0, %c0_i32, %c0_i32_0, %c0_i32_1 : i32, i32, i32, i32
  }
}

</mosaic_0001>

<llo_original>
// kernel: tpu_custom_call.1
$region0: #{tpu_custom_call.1}
  #allocation0 [shape = 'u32[]', space=smem, size = 0x4, offset = 0x4, fixed_abs, tag = 'smem constant byte address 0x4 - core index']
  #allocation1 [shape = 'u32[144,128]{1,0:T(1,128)}', space=vmem, size = 0x12000, scoped, tag = 'internal scratch']
  #allocation2 [shape = 's32[1]{0}', space=sflag, size = 0x4, scoped, tag = 'scoped memory for tpu_custom_call.1']
  #allocation3 [shape = 'u8[512]{0}', space=smem, size = 0x200, scoped, tag = 'prefetched SMEM operand 0']
  %s0 = inlined_call_operand.hbm [shape: s32[8], index: 0, kind: input, shape index: {}]
  %s1 = inlined_call_operand.hbm [shape: f32[4,4,16,16], index: 1, kind: input, shape index: {}]
  %s2 = inlined_call_operand.hbm [shape: f32[4,4,16,16], index: 2, kind: output, shape index: {}]
  %s3 = sld [smem:[#allocation0]]
  $region41: #{tpu_custom_call.1} parent=0
    _
  %s5 = ssub.s32 1, %s3
  %s6 = scalar_select 0, %s5, %s3
  %8 = dma.hbm_to_smem %s0, 16, [#allocation3], [#allocation2]
  %9 = dma.done [#allocation2], 16
  %10 = sfence
  $region1: #{tpu_custom_call.1} parent=0
    #allocation4 [shape = 'u8[65536]{0}', space=vmem, size = 0x10000, scoped, tag = 'input window, operand 1']
    #allocation5 [shape = 's32[2]{0}', space=sflag, size = 0x8, scoped, tag = 'scoped memory for tpu_custom_call.1']
    #allocation6 [shape = 's32[2]{0}', space=sflag, size = 0x8, scoped, tag = 'scoped memory for tpu_custom_call.1']
    #allocation7 [shape = 'u8[65536]{0}', space=vmem, size = 0x10000, scoped, tag = 'output window, operand 0']
    %11 = vsyncpa [#allocation5], 0
    %s12 = scalar_lea.sflag [#allocation5], 1
    %13 = vsyncpa %s12, 0
    %14 = vsyncpa [#allocation6], 0
    %s15 = scalar_lea.sflag [#allocation6], 1
    %16 = vsyncpa %s15, 0
    loop: start=0, step=1, limit=6
    $region2: #{tpu_custom_call.1} parent=1 // loop_pre_header
      _
    $region3: #{tpu_custom_call.1} parent=1 // loop_header
      %s18 = sphi 0, %s22
      %p19 = scmp.ge.s32.totalorder %s18, 6
      %s28 = sphi 0, %s30
      %s31 = sphi 0, %s28
      %s32 = sphi 0, %s31
      %s48 = sphi 0, %s32
      %s54 = sphi 0, %s56
      %s57 = sphi 0, %s54
      %s58 = sphi 0, %s57
      %s74 = sphi 0, %s58
    $region4: #{tpu_custom_call.1} parent=1 // loop_header_branch
      %21 = sbr.rel (%p19) target = $region8
    $region5: #{tpu_custom_call.1} parent=1 // loop_body
      %s23 = ssub.s32 %s18, 1
      %s24 = ssub.s32 %s18, 2
      %s25 = sadd.s32 %s18, 1
      %s26 = ssub.s32 %s18, %s25
      %p27 = scmp.eq.s32.totalorder %s26, 0
      %s29 = sadd.s32 %s28, 1
      %s30 = scalar_select %p27, %s28, %s29
      %p33 = pneg %p27
      %p34 = scmp.eq.s32.totalorder %s18, 3
      %p35 = por %p33, %p34
      %p36 = scmp.ne.s32.totalorder %s28, %s31
      %p37 = scmp.eq.s32.totalorder %s18, 0
      %p38 = por %p36, %p37
      %p39 = scmp.ne.s32.totalorder %s28, %s31
      %p40 = scmp.eq.s32.totalorder %s23, 3
      %p41 = por %p39, %p40
      %p42 = scmp.ne.s32.totalorder %s31, %s32
      %p43 = scmp.eq.s32.totalorder %s23, 0
      %p44 = por %p42, %p43
      %p45 = scmp.ne.s32.totalorder %s31, %s32
      %p46 = scmp.eq.s32.totalorder %s24, 3
      %p47 = por %p45, %p46
      %p49 = scmp.ne.s32.totalorder %s32, %s48
      %p50 = scmp.eq.s32.totalorder %s24, 0
      %p51 = por %p49, %p50
      %s52 = ssub.s32 %s18, %s25
      %p53 = scmp.eq.s32.totalorder %s52, 0
      %s55 = sadd.s32 %s54, 1
      %s56 = scalar_select %p53, %s54, %s55
      %p59 = pneg %p53
      %p60 = scmp.eq.s32.totalorder %s18, 3
      %p61 = por %p59, %p60
      %p62 = scmp.ne.s32.totalorder %s54, %s57
      %p63 = scmp.eq.s32.totalorder %s18, 0
      %p64 = por %p62, %p63
      %p65 = scmp.ne.s32.totalorder %s54, %s57
      %p66 = scmp.eq.s32.totalorder %s23, 3
      %p67 = por %p65, %p66
      %p68 = scmp.ne.s32.totalorder %s57, %s58
      %p69 = scmp.eq.s32.totalorder %s23, 0
      %p70 = por %p68, %p69
      %p71 = scmp.ne.s32.totalorder %s57, %s58
      %p72 = scmp.eq.s32.totalorder %s24, 3
      %p73 = por %p71, %p72
      %p75 = scmp.ne.s32.totalorder %s58, %s74
      %p76 = scmp.eq.s32.totalorder %s24, 0
      %p77 = por %p75, %p76
      %p78 = scmp.le.s32.totalorder 1, %s18
      %p79 = scmp.lt.s32.totalorder %s18, 5
      %p80 = pnand %p78, %p79
      %p81 = pneg %p80
      // Predicated region
      $region9: #{tpu_custom_call.1} parent=5 // pred_check
        _
      $region10: #{tpu_custom_call.1} parent=5 // pred_check_branch
        %83 = sbr.rel (%p80) target = $region12
      $region11: #{tpu_custom_call.1} parent=5 // pred_region
        %s84 = ssub.s32 %s18, 1
      $region12: #{tpu_custom_call.1} parent=5 // pred_fallthru
        _
      %p85 = scmp.lt.s32.totalorder %s18, 4
      // Predicated region
      $region13: #{tpu_custom_call.1} parent=5 // pred_check
        %p86 = pneg %p85
      $region14: #{tpu_custom_call.1} parent=5 // pred_check_branch
        %88 = sbr.rel (%p86) target = $region16
      $region15: #{tpu_custom_call.1} parent=5 // pred_region
        // Predicated region
        $region17: #{tpu_custom_call.1} parent=15 // pred_check
          %p89 = pneg %p38
        $region18: #{tpu_custom_call.1} parent=15 // pred_check_branch
          %91 = sbr.rel (%p89) target = $region20
        $region19: #{tpu_custom_call.1} parent=15 // pred_region
          %s92 = sand.u32 %s28, 1
          %s93 = scalar_lea.sflag [#allocation5], %s92
          %s94 = sand.u32 %s28, 1
          %s95 = smul.addr %s94, 64
          %s96 = scalar_lea.vmem [#allocation4], %s95
          %s98 = ssub.s32 1024, 1024
          %99 = vsyncadd %s93, %s98
          %s100 = smul.addr %s18, 8
          %s101 = smul.addr %s100, 128
          %s102 = scalar_lea.hbm %s1, %s101
          %s103 = sshll.u32 %s96, 4
          %s104 = int_to_ptr.vmem [resolvable:$true] %s103
          %109 = dma.hbm_to_vmem [thread:$0]  %s102, 1024, %s104, %s93, 128, 128, 8
        $region20: #{tpu_custom_call.1} parent=15 // pred_fallthru
          _
      $region16: #{tpu_custom_call.1} parent=5 // pred_fallthru
        _
      %p110 = scmp.le.s32.totalorder 1, %s18
      %p111 = scmp.lt.s32.totalorder %s18, 5
      %p112 = pnand %p110, %p111
      %p113 = pneg %p112
      // Predicated region
      $region21: #{tpu_custom_call.1} parent=5 // pred_check
        _
      $region22: #{tpu_custom_call.1} parent=5 // pred_check_branch
        %115 = sbr.rel (%p112) target = $region24
      $region23: #{tpu_custom_call.1} parent=5 // pred_region
        %s116 = ssub.s32 %s18, 1
        %s117 = sand.u32 %s31, 1
        %s118 = scalar_lea.sflag [#allocation5], %s117
        %s119 = sand.u32 %s31, 1
        %s120 = smul.addr %s119, 64
        %s121 = scalar_lea.vmem [#allocation4], %s120
        // Predicated region
        $region25: #{tpu_custom_call.1} parent=23 // pred_check
          %p122 = pneg %p44
        $region26: #{tpu_custom_call.1} parent=23 // pred_check_branch
          %124 = sbr.rel (%p122) target = $region28
        $region27: #{tpu_custom_call.1} parent=23 // pred_region
          %125 = dma.done %s118, 1024
        $region28: #{tpu_custom_call.1} parent=23 // pred_fallthru
          _
        %s126 = sand.u32 %s31, 1
        %s127 = scalar_lea.sflag [#allocation5], %s126
        %s128 = sand.u32 %s31, 1
        %s129 = smul.addr %s128, 64
        %s130 = scalar_lea.vmem [#allocation4], %s129
        %p131 = pneg %p44
        %p132 = pneg %p41
        %p133 = pneg %p70
        %p134 = pneg %p67
        %s135 = sand.u32 %s57, 1
        %s136 = scalar_lea.sflag [#allocation6], %s135
        %s137 = sand.u32 %s57, 1
        %s138 = smul.addr %s137, 64
        %s139 = scalar_lea.vmem [#allocation7], %s138
        %s140 = smul.u32 %s23, 2
        %s141 = sld [smem:[#allocation3 + %s140]]
        %s142 = ssub.s32 %s141, 4
        %s143 = sadd.s32 %s140, 1
        %s144 = sld [smem:[#allocation3 + %s143]]
        %s145 = ssub.s32 %s144, 4
        %v146 = vlaneseq
        %v147 = vshrl.u32 %v146, 7
        %v148 = vadd.s32 %v147, 8
        %v149 = vlaneseq
        %v150 = vand.u32 %v149, 127
        %v151 = vstv %s145
        %v152 = vadd.s32 %v147, %v151
        %v153 = vadd.s32 %v148, %v151
        %vm154 = vcmp.gt.s32.totalorder %v152, 0
        %v155 = vsel %vm154, %v152, 0
        %vm156 = vcmp.gt.s32.totalorder %v153, 0
        %v157 = vsel %vm156, %v153, 0
        %vm158 = vcmp.lt.s32.totalorder %v155, 15
        %v159 = vsel %vm158, %v155, 15
        %vm160 = vcmp.lt.s32.totalorder %v157, 15
        %v161 = vsel %vm160, %v157, 15
        %vm162 = vcmp.eq.s32.totalorder %v150, %v159
        %vm163 = vcmp.eq.s32.totalorder %v150, %v161
        %v164 = vsel %vm162, 1, 0
        %v165 = vsel %vm163, 1, 0
        %v166 = vcvt.s32.f32 %v164
        %v167 = vcvt.s32.f32 %v165
        %v168 = vstv %s142
        %v169 = vadd.s32 %v147, %v168
        %v170 = vadd.s32 %v148, %v168
        %vm171 = vcmp.gt.s32.totalorder %v169, 0
        %v172 = vsel %vm171, %v169, 0
        %vm173 = vcmp.gt.s32.totalorder %v170, 0
        %v174 = vsel %vm173, %v170, 0
        %vm175 = vcmp.lt.s32.totalorder %v172, 15
        %v176 = vsel %vm175, %v172, 15
        %vm177 = vcmp.lt.s32.totalorder %v174, 15
        %v178 = vsel %vm177, %v174, 15
        %vm179 = vcmp.eq.s32.totalorder %v150, %v176
        %vm180 = vcmp.eq.s32.totalorder %v150, %v178
        %v181 = vsel %vm179, 1, 0
        %v182 = vsel %vm180, 1, 0
        %v183 = vcvt.s32.f32 %v181
        %v184 = vcvt.s32.f32 %v182
        %v185 = vld [vmem:[%s121] sm:$0xff]
        %v186 = vld [vmem:[%s121 + $0x8] sm:$0xff]
        %v187 = vld [vmem:[%s121 + $0x10] sm:$0xff]
        %v188 = vld [vmem:[%s121 + $0x18] sm:$0xff]
        %v189 = vld [vmem:[%s121 + $0x20] sm:$0xff]
        %v190 = vld [vmem:[%s121 + $0x28] sm:$0xff]
        %v191 = vld [vmem:[%s121 + $0x30] sm:$0xff]
        %v192 = vld [vmem:[%s121 + $0x38] sm:$0xff]
        %vm193 = vcmask 130048
        %v195 = vsel %vm193, %v185, 0
        %v198 = vsel %vm193, %v186, 0
        %v201 = vsel %vm193, %v183, 0
        %v204 = vsel %vm193, %v184, 0
        %206 = vmatprep.subr.mxu0 0.0
        %207 = vmatpush1.xpose.msra.mxu0 %v201
        %208 = vmatprep.subr.mxu0 0.0
        %209 = vmatpush1.xpose.msra.mxu0 %v204
        %210 = vmatprep.subr.mxu0 0.0
        %211 = vmatpush1.xpose.msra.mxu0 0.0
        %212 = vmatprep.subr.mxu0 0.0
        %213 = vmatpush1.xpose.msra.mxu0 0.0
        %214 = vmatprep.subr.mxu0 0.0
        %215 = vmatpush1.xpose.msra.mxu0 0.0
        %216 = vmatprep.subr.mxu0 0.0
        %217 = vmatpush1.xpose.msra.mxu0 0.0
        %218 = vmatprep.subr.mxu0 0.0
        %219 = vmatpush1.xpose.msra.mxu0 0.0
        %220 = vmatprep.subr.mxu0 0.0
        %221 = vmatpush1.xpose.msra.mxu0 0.0
        %222 = vmatprep.subr.mxu0 0.0
        %223 = vmatpush1.xpose.msra.mxu0 0.0
        %224 = vmatprep.subr.mxu0 0.0
        %225 = vmatpush1.xpose.msra.mxu0 0.0
        %226 = vmatprep.subr.mxu0 0.0
        %227 = vmatpush1.xpose.msra.mxu0 0.0
        %228 = vmatprep.subr.mxu0 0.0
        %229 = vmatpush1.xpose.msra.mxu0 0.0
        %230 = vmatprep.subr.mxu0 0.0
        %231 = vmatpush1.xpose.msra.mxu0 0.0
        %232 = vmatprep.subr.mxu0 0.0
        %233 = vmatpush1.xpose.msra.mxu0 0.0
        %234 = vmatprep.subr.mxu0 0.0
        %235 = vmatpush1.xpose.msra.mxu0 0.0
        %236 = vmatprep.subr.mxu0 0.0
        %237 = vmatpush1.xpose.msra.mxu0 0.0
        %238 = vmatprep.subr.mxu0 0.0
        %239 = vmatpush1.xpose.msra.mxu0 0.0
        %240 = vmatprep.subr.mxu0 0.0
        %241 = vmatpush1.xpose.msra.mxu0 0.0
        %242 = vmatprep.subr.mxu0 0.0
        %243 = vmatpush1.xpose.msra.mxu0 0.0
        %244 = vmatprep.subr.mxu0 0.0
        %245 = vmatpush1.xpose.msra.mxu0 0.0
        %246 = vmatprep.subr.mxu0 0.0
        %247 = vmatpush1.xpose.msra.mxu0 0.0
        %248 = vmatprep.subr.mxu0 0.0
        %249 = vmatpush1.xpose.msra.mxu0 0.0
        %250 = vmatprep.subr.mxu0 0.0
        %251 = vmatpush1.xpose.msra.mxu0 0.0
        %252 = vmatprep.subr.mxu0 0.0
        %253 = vmatpush1.xpose.msra.mxu0 0.0
        %254 = vmatprep.subr.mxu0 0.0
        %255 = vmatpush1.xpose.msra.mxu0 0.0
        %256 = vmatprep.subr.mxu0 0.0
        %257 = vmatpush1.xpose.msra.mxu0 0.0
        %258 = vmatprep.subr.mxu0 0.0
        %259 = vmatpush1.xpose.msra.mxu0 0.0
        %260 = vmatprep.subr.mxu0 0.0
        %261 = vmatpush1.xpose.msra.mxu0 0.0
        %262 = vmatprep.subr.mxu0 0.0
        %263 = vmatpush1.xpose.msra.mxu0 0.0
        %264 = vmatprep.subr.mxu0 0.0
        %265 = vmatpush1.xpose.msra.mxu0 0.0
        %266 = vmatprep.subr.mxu0 0.0
        %267 = vmatpush1.xpose.msra.mxu0 0.0
        %268 = vmatprep.subr.mxu0 0.0
        %269 = vmatpush1.xpose.msra.mxu0 0.0
        %270 = vmatprep.mubr.f32.mxu0 0.0
        %271 = vmatmul.mubr.f32.gmra.mrb[0].mxu0 %v195
        %v272 = vpop.f32.mrb[0].mxu0
        %v273 = vadd.f32 0.0, %v272
        %v274 = vpop.f32.mrb[0].mxu0
        %275 = vmatprep.mubr.f32.mxu0 0.0
        %276 = vmatmul.mubr.f32.gmra.mrb[0].mxu0 %v198
        %v277 = vpop.f32.mrb[0].mxu0
        %v278 = vadd.f32 0.0, %v277
        %v279 = vpop.f32.mrb[0].mxu0
        %280 = vdwg.mxu0
        %v282 = vsel %vm193, %v187, 0
        %v285 = vsel %vm193, %v188, 0
        %287 = vmatprep.subr.mxu0 0.0
        %288 = vmatpush1.xpose.msra.mxu0 %v201
        %289 = vmatprep.subr.mxu0 0.0
        %290 = vmatpush1.xpose.msra.mxu0 %v204
        %291 = vmatprep.subr.mxu0 0.0
        %292 = vmatpush1.xpose.msra.mxu0 0.0
        %293 = vmatprep.subr.mxu0 0.0
        %294 = vmatpush1.xpose.msra.mxu0 0.0
        %295 = vmatprep.subr.mxu0 0.0
        %296 = vmatpush1.xpose.msra.mxu0 0.0
        %297 = vmatprep.subr.mxu0 0.0
        %298 = vmatpush1.xpose.msra.mxu0 0.0
        %299 = vmatprep.subr.mxu0 0.0
        %300 = vmatpush1.xpose.msra.mxu0 0.0
        %301 = vmatprep.subr.mxu0 0.0
        %302 = vmatpush1.xpose.msra.mxu0 0.0
        %303 = vmatprep.subr.mxu0 0.0
        %304 = vmatpush1.xpose.msra.mxu0 0.0
        %305 = vmatprep.subr.mxu0 0.0
        %306 = vmatpush1.xpose.msra.mxu0 0.0
        %307 = vmatprep.subr.mxu0 0.0
        %308 = vmatpush1.xpose.msra.mxu0 0.0
        %309 = vmatprep.subr.mxu0 0.0
        %310 = vmatpush1.xpose.msra.mxu0 0.0
        %311 = vmatprep.subr.mxu0 0.0
        %312 = vmatpush1.xpose.msra.mxu0 0.0
        %313 = vmatprep.subr.mxu0 0.0
        %314 = vmatpush1.xpose.msra.mxu0 0.0
        %315 = vmatprep.subr.mxu0 0.0
        %316 = vmatpush1.xpose.msra.mxu0 0.0
        %317 = vmatprep.subr.mxu0 0.0
        %318 = vmatpush1.xpose.msra.mxu0 0.0
        %319 = vmatprep.subr.mxu0 0.0
        %320 = vmatpush1.xpose.msra.mxu0 0.0
        %321 = vmatprep.subr.mxu0 0.0
        %322 = vmatpush1.xpose.msra.mxu0 0.0
        %323 = vmatprep.subr.mxu0 0.0
        %324 = vmatpush1.xpose.msra.mxu0 0.0
        %325 = vmatprep.subr.mxu0 0.0
        %326 = vmatpush1.xpose.msra.mxu0 0.0
        %327 = vmatprep.subr.mxu0 0.0
        %328 = vmatpush1.xpose.msra.mxu0 0.0
        %329 = vmatprep.subr.mxu0 0.0
        %330 = vmatpush1.xpose.msra.mxu0 0.0
        %331 = vmatprep.subr.mxu0 0.0
        %332 = vmatpush1.xpose.msra.mxu0 0.0
        %333 = vmatprep.subr.mxu0 0.0
        %334 = vmatpush1.xpose.msra.mxu0 0.0
        %335 = vmatprep.subr.mxu0 0.0
        %336 = vmatpush1.xpose.msra.mxu0 0.0
        %337 = vmatprep.subr.mxu0 0.0
        %338 = vmatpush1.xpose.msra.mxu0 0.0
        %339 = vmatprep.subr.mxu0 0.0
        %340 = vmatpush1.xpose.msra.mxu0 0.0
        %341 = vmatprep.subr.mxu0 0.0
        %342 = vmatpush1.xpose.msra.mxu0 0.0
        %343 = vmatprep.subr.mxu0 0.0
        %344 = vmatpush1.xpose.msra.mxu0 0.0
        %345 = vmatprep.subr.mxu0 0.0
        %346 = vmatpush1.xpose.msra.mxu0 0.0
        %347 = vmatprep.subr.mxu0 0.0
        %348 = vmatpush1.xpose.msra.mxu0 0.0
        %349 = vmatprep.subr.mxu0 0.0
        %350 = vmatpush1.xpose.msra.mxu0 0.0
        %351 = vmatprep.mubr.f32.mxu0 0.0
        %352 = vmatmul.mubr.f32.gmra.mrb[0].mxu0 %v282
        %v353 = vpop.f32.mrb[0].mxu0
        %v354 = vadd.f32 0.0, %v353
        %v355 = vpop.f32.mrb[0].mxu0
        %356 = vmatprep.mubr.f32.mxu0 0.0
        %357 = vmatmul.mubr.f32.gmra.mrb[0].mxu0 %v285
        %v358 = vpop.f32.mrb[0].mxu0
        %v359 = vadd.f32 0.0, %v358
        %v360 = vpop.f32.mrb[0].mxu0
        %361 = vdwg.mxu0
        %v363 = vsel %vm193, %v189, 0
        %v366 = vsel %vm193, %v190, 0
        %368 = vmatprep.subr.mxu0 0.0
        %369 = vmatpush1.xpose.msra.mxu0 %v201
        %370 = vmatprep.subr.mxu0 0.0
        %371 = vmatpush1.xpose.msra.mxu0 %v204
        %372 = vmatprep.subr.mxu0 0.0
        %373 = vmatpush1.xpose.msra.mxu0 0.0
        %374 = vmatprep.subr.mxu0 0.0
        %375 = vmatpush1.xpose.msra.mxu0 0.0
        %376 = vmatprep.subr.mxu0 0.0
        %377 = vmatpush1.xpose.msra.mxu0 0.0
        %378 = vmatprep.subr.mxu0 0.0
        %379 = vmatpush1.xpose.msra.mxu0 0.0
        %380 = vmatprep.subr.mxu0 0.0
        %381 = vmatpush1.xpose.msra.mxu0 0.0
        %382 = vmatprep.subr.mxu0 0.0
        %383 = vmatpush1.xpose.msra.mxu0 0.0
        %384 = vmatprep.subr.mxu0 0.0
        %385 = vmatpush1.xpose.msra.mxu0 0.0
        %386 = vmatprep.subr.mxu0 0.0
        %387 = vmatpush1.xpose.msra.mxu0 0.0
        %388 = vmatprep.subr.mxu0 0.0
        %389 = vmatpush1.xpose.msra.mxu0 0.0
        %390 = vmatprep.subr.mxu0 0.0
        %391 = vmatpush1.xpose.msra.mxu0 0.0
        %392 = vmatprep.subr.mxu0 0.0
        %393 = vmatpush1.xpose.msra.mxu0 0.0
        %394 = vmatprep.subr.mxu0 0.0
        %395 = vmatpush1.xpose.msra.mxu0 0.0
        %396 = vmatprep.subr.mxu0 0.0
        %397 = vmatpush1.xpose.msra.mxu0 0.0
        %398 = vmatprep.subr.mxu0 0.0
        %399 = vmatpush1.xpose.msra.mxu0 0.0
        %400 = vmatprep.subr.mxu0 0.0
        %401 = vmatpush1.xpose.msra.mxu0 0.0
        %402 = vmatprep.subr.mxu0 0.0
        %403 = vmatpush1.xpose.msra.mxu0 0.0
        %404 = vmatprep.subr.mxu0 0.0
        %405 = vmatpush1.xpose.msra.mxu0 0.0
        %406 = vmatprep.subr.mxu0 0.0
        %407 = vmatpush1.xpose.msra.mxu0 0.0
        %408 = vmatprep.subr.mxu0 0.0
        %409 = vmatpush1.xpose.msra.mxu0 0.0
        %410 = vmatprep.subr.mxu0 0.0
        %411 = vmatpush1.xpose.msra.mxu0 0.0
        %412 = vmatprep.subr.mxu0 0.0
        %413 = vmatpush1.xpose.msra.mxu0 0.0
        %414 = vmatprep.subr.mxu0 0.0
        %415 = vmatpush1.xpose.msra.mxu0 0.0
        %416 = vmatprep.subr.mxu0 0.0
        %417 = vmatpush1.xpose.msra.mxu0 0.0
        %418 = vmatprep.subr.mxu0 0.0
        %419 = vmatpush1.xpose.msra.mxu0 0.0
        %420 = vmatprep.subr.mxu0 0.0
        %421 = vmatpush1.xpose.msra.mxu0 0.0
        %422 = vmatprep.subr.mxu0 0.0
        %423 = vmatpush1.xpose.msra.mxu0 0.0
        %424 = vmatprep.subr.mxu0 0.0
        %425 = vmatpush1.xpose.msra.mxu0 0.0
        %426 = vmatprep.subr.mxu0 0.0
        %427 = vmatpush1.xpose.msra.mxu0 0.0
        %428 = vmatprep.subr.mxu0 0.0
        %429 = vmatpush1.xpose.msra.mxu0 0.0
        %430 = vmatprep.subr.mxu0 0.0
        %431 = vmatpush1.xpose.msra.mxu0 0.0
        %432 = vmatprep.mubr.f32.mxu0 0.0
        %433 = vmatmul.mubr.f32.gmra.mrb[0].mxu0 %v363
        %v434 = vpop.f32.mrb[0].mxu0
        %v435 = vadd.f32 0.0, %v434
        %v436 = vpop.f32.mrb[0].mxu0
        %437 = vmatprep.mubr.f32.mxu0 0.0
        %438 = vmatmul.mubr.f32.gmra.mrb[0].mxu0 %v366
        %v439 = vpop.f32.mrb[0].mxu0
        %v440 = vadd.f32 0.0, %v439
        %v441 = vpop.f32.mrb[0].mxu0
        %442 = vdwg.mxu0
        %v444 = vsel %vm193, %v191, 0
        %v447 = vsel %vm193, %v192, 0
        %449 = vmatprep.subr.mxu0 0.0
        %450 = vmatpush1.xpose.msra.mxu0 %v201
        %451 = vmatprep.subr.mxu0 0.0
        %452 = vmatpush1.xpose.msra.mxu0 %v204
        %453 = vmatprep.subr.mxu0 0.0
        %454 = vmatpush1.xpose.msra.mxu0 0.0
        %455 = vmatprep.subr.mxu0 0.0
        %456 = vmatpush1.xpose.msra.mxu0 0.0
        %457 = vmatprep.subr.mxu0 0.0
        %458 = vmatpush1.xpose.msra.mxu0 0.0
        %459 = vmatprep.subr.mxu0 0.0
        %460 = vmatpush1.xpose.msra.mxu0 0.0
        %461 = vmatprep.subr.mxu0 0.0
        %462 = vmatpush1.xpose.msra.mxu0 0.0
        %463 = vmatprep.subr.mxu0 0.0
        %464 = vmatpush1.xpose.msra.mxu0 0.0
        %465 = vmatprep.subr.mxu0 0.0
        %466 = vmatpush1.xpose.msra.mxu0 0.0
        %467 = vmatprep.subr.mxu0 0.0
        %468 = vmatpush1.xpose.msra.mxu0 0.0
        %469 = vmatprep.subr.mxu0 0.0
        %470 = vmatpush1.xpose.msra.mxu0 0.0
        %471 = vmatprep.subr.mxu0 0.0
        %472 = vmatpush1.xpose.msra.mxu0 0.0
        %473 = vmatprep.subr.mxu0 0.0
        %474 = vmatpush1.xpose.msra.mxu0 0.0
        %475 = vmatprep.subr.mxu0 0.0
        %476 = vmatpush1.xpose.msra.mxu0 0.0
        %477 = vmatprep.subr.mxu0 0.0
        %478 = vmatpush1.xpose.msra.mxu0 0.0
        %479 = vmatprep.subr.mxu0 0.0
        %480 = vmatpush1.xpose.msra.mxu0 0.0
        %481 = vmatprep.subr.mxu0 0.0
        %482 = vmatpush1.xpose.msra.mxu0 0.0
        %483 = vmatprep.subr.mxu0 0.0
        %484 = vmatpush1.xpose.msra.mxu0 0.0
        %485 = vmatprep.subr.mxu0 0.0
        %486 = vmatpush1.xpose.msra.mxu0 0.0
        %487 = vmatprep.subr.mxu0 0.0
        %488 = vmatpush1.xpose.msra.mxu0 0.0
        %489 = vmatprep.subr.mxu0 0.0
        %490 = vmatpush1.xpose.msra.mxu0 0.0
        %491 = vmatprep.subr.mxu0 0.0
        %492 = vmatpush1.xpose.msra.mxu0 0.0
        %493 = vmatprep.subr.mxu0 0.0
        %494 = vmatpush1.xpose.msra.mxu0 0.0
        %495 = vmatprep.subr.mxu0 0.0
        %496 = vmatpush1.xpose.msra.mxu0 0.0
        %497 = vmatprep.subr.mxu0 0.0
        %498 = vmatpush1.xpose.msra.mxu0 0.0
        %499 = vmatprep.subr.mxu0 0.0
        %500 = vmatpush1.xpose.msra.mxu0 0.0
        %501 = vmatprep.subr.mxu0 0.0
        %502 = vmatpush1.xpose.msra.mxu0 0.0
        %503 = vmatprep.subr.mxu0 0.0
        %504 = vmatpush1.xpose.msra.mxu0 0.0
        %505 = vmatprep.subr.mxu0 0.0
        %506 = vmatpush1.xpose.msra.mxu0 0.0
        %507 = vmatprep.subr.mxu0 0.0
        %508 = vmatpush1.xpose.msra.mxu0 0.0
        %509 = vmatprep.subr.mxu0 0.0
        %510 = vmatpush1.xpose.msra.mxu0 0.0
        %511 = vmatprep.subr.mxu0 0.0
        %512 = vmatpush1.xpose.msra.mxu0 0.0
        %513 = vmatprep.mubr.f32.mxu0 0.0
        %514 = vmatmul.mubr.f32.gmra.mrb[0].mxu0 %v444
        %v515 = vpop.f32.mrb[0].mxu0
        %v516 = vadd.f32 0.0, %v515
        %v517 = vpop.f32.mrb[0].mxu0
        %518 = vmatprep.mubr.f32.mxu0 0.0
        %519 = vmatmul.mubr.f32.gmra.mrb[0].mxu0 %v447
        %v520 = vpop.f32.mrb[0].mxu0
        %v521 = vadd.f32 0.0, %v520
        %v522 = vpop.f32.mrb[0].mxu0
        %523 = vdwg.mxu0
        %v525 = vsel %vm193, %v166, 0
        %v528 = vsel %vm193, %v167, 0
        %530 = vmatprep.subr.mxu0 0.0
        %531 = vmatpush1.msra.mxu0 %v273
        %532 = vmatprep.subr.mxu0 0.0
        %533 = vmatpush1.msra.mxu0 %v278
        %534 = vmatprep.subr.mxu0 0.0
        %535 = vmatpush1.msra.mxu0 0.0
        %536 = vmatprep.subr.mxu0 0.0
        %537 = vmatpush1.msra.mxu0 0.0
        %538 = vmatprep.subr.mxu0 0.0
        %539 = vmatpush1.msra.mxu0 0.0
        %540 = vmatprep.subr.mxu0 0.0
        %541 = vmatpush1.msra.mxu0 0.0
        %542 = vmatprep.subr.mxu0 0.0
        %543 = vmatpush1.msra.mxu0 0.0
        %544 = vmatprep.subr.mxu0 0.0
        %545 = vmatpush1.msra.mxu0 0.0
        %546 = vmatprep.subr.mxu0 0.0
        %547 = vmatpush1.msra.mxu0 0.0
        %548 = vmatprep.subr.mxu0 0.0
        %549 = vmatpush1.msra.mxu0 0.0
        %550 = vmatprep.subr.mxu0 0.0
        %551 = vmatpush1.msra.mxu0 0.0
        %552 = vmatprep.subr.mxu0 0.0
        %553 = vmatpush1.msra.mxu0 0.0
        %554 = vmatprep.subr.mxu0 0.0
        %555 = vmatpush1.msra.mxu0 0.0
        %556 = vmatprep.subr.mxu0 0.0
        %557 = vmatpush1.msra.mxu0 0.0
        %558 = vmatprep.subr.mxu0 0.0
        %559 = vmatpush1.msra.mxu0 0.0
        %560 = vmatprep.subr.mxu0 0.0
        %561 = vmatpush1.msra.mxu0 0.0
        %562 = vmatprep.subr.mxu0 0.0
        %563 = vmatpush1.msra.mxu0 0.0
        %564 = vmatprep.subr.mxu0 0.0
        %565 = vmatpush1.msra.mxu0 0.0
        %566 = vmatprep.subr.mxu0 0.0
        %567 = vmatpush1.msra.mxu0 0.0
        %568 = vmatprep.subr.mxu0 0.0
        %569 = vmatpush1.msra.mxu0 0.0
        %570 = vmatprep.subr.mxu0 0.0
        %571 = vmatpush1.msra.mxu0 0.0
        %572 = vmatprep.subr.mxu0 0.0
        %573 = vmatpush1.msra.mxu0 0.0
        %574 = vmatprep.subr.mxu0 0.0
        %575 = vmatpush1.msra.mxu0 0.0
        %576 = vmatprep.subr.mxu0 0.0
        %577 = vmatpush1.msra.mxu0 0.0
        %578 = vmatprep.subr.mxu0 0.0
        %579 = vmatpush1.msra.mxu0 0.0
        %580 = vmatprep.subr.mxu0 0.0
        %581 = vmatpush1.msra.mxu0 0.0
        %582 = vmatprep.subr.mxu0 0.0
        %583 = vmatpush1.msra.mxu0 0.0
        %584 = vmatprep.subr.mxu0 0.0
        %585 = vmatpush1.msra.mxu0 0.0
        %586 = vmatprep.subr.mxu0 0.0
        %587 = vmatpush1.msra.mxu0 0.0
        %588 = vmatprep.subr.mxu0 0.0
        %589 = vmatpush1.msra.mxu0 0.0
        %590 = vmatprep.subr.mxu0 0.0
        %591 = vmatpush1.msra.mxu0 0.0
        %592 = vmatprep.subr.mxu0 0.0
        %593 = vmatpush1.msra.mxu0 0.0
        %594 = vmatprep.mubr.f32.mxu0 0.0
        %595 = vmatmul.mubr.f32.gmra.mrb[0].mxu0 %v525
        %v596 = vpop.f32.mrb[0].mxu0
        %v597 = vadd.f32 0.0, %v596
        %v598 = vpop.f32.mrb[0].mxu0
        %599 = vmatprep.mubr.f32.mxu0 0.0
        %600 = vmatmul.mubr.f32.gmra.mrb[0].mxu0 %v528
        %v601 = vpop.f32.mrb[0].mxu0
        %v602 = vadd.f32 0.0, %v601
        %v603 = vpop.f32.mrb[0].mxu0
        %604 = vdwg.mxu0
        %605 = vmatprep.subr.mxu0 0.0
        %606 = vmatpush1.msra.mxu0 %v354
        %607 = vmatprep.subr.mxu0 0.0
        %608 = vmatpush1.msra.mxu0 %v359
        %609 = vmatprep.subr.mxu0 0.0
        %610 = vmatpush1.msra.mxu0 0.0
        %611 = vmatprep.subr.mxu0 0.0
        %612 = vmatpush1.msra.mxu0 0.0
        %613 = vmatprep.subr.mxu0 0.0
        %614 = vmatpush1.msra.mxu0 0.0
        %615 = vmatprep.subr.mxu0 0.0
        %616 = vmatpush1.msra.mxu0 0.0
        %617 = vmatprep.subr.mxu0 0.0
        %618 = vmatpush1.msra.mxu0 0.0
        %619 = vmatprep.subr.mxu0 0.0
        %620 = vmatpush1.msra.mxu0 0.0
        %621 = vmatprep.subr.mxu0 0.0
        %622 = vmatpush1.msra.mxu0 0.0
        %623 = vmatprep.subr.mxu0 0.0
        %624 = vmatpush1.msra.mxu0 0.0
        %625 = vmatprep.subr.mxu0 0.0
        %626 = vmatpush1.msra.mxu0 0.0
        %627 = vmatprep.subr.mxu0 0.0
        %628 = vmatpush1.msra.mxu0 0.0
        %629 = vmatprep.subr.mxu0 0.0
        %630 = vmatpush1.msra.mxu0 0.0
        %631 = vmatprep.subr.mxu0 0.0
        %632 = vmatpush1.msra.mxu0 0.0
        %633 = vmatprep.subr.mxu0 0.0
        %634 = vmatpush1.msra.mxu0 0.0
        %635 = vmatprep.subr.mxu0 0.0
        %636 = vmatpush1.msra.mxu0 0.0
        %637 = vmatprep.subr.mxu0 0.0
        %638 = vmatpush1.msra.mxu0 0.0
        %639 = vmatprep.subr.mxu0 0.0
        %640 = vmatpush1.msra.mxu0 0.0
        %641 = vmatprep.subr.mxu0 0.0
        %642 = vmatpush1.msra.mxu0 0.0
        %643 = vmatprep.subr.mxu0 0.0
        %644 = vmatpush1.msra.mxu0 0.0
        %645 = vmatprep.subr.mxu0 0.0
        %646 = vmatpush1.msra.mxu0 0.0
        %647 = vmatprep.subr.mxu0 0.0
        %648 = vmatpush1.msra.mxu0 0.0
        %649 = vmatprep.subr.mxu0 0.0
        %650 = vmatpush1.msra.mxu0 0.0
        %651 = vmatprep.subr.mxu0 0.0
        %652 = vmatpush1.msra.mxu0 0.0
        %653 = vmatprep.subr.mxu0 0.0
        %654 = vmatpush1.msra.mxu0 0.0
        %655 = vmatprep.subr.mxu0 0.0
        %656 = vmatpush1.msra.mxu0 0.0
        %657 = vmatprep.subr.mxu0 0.0
        %658 = vmatpush1.msra.mxu0 0.0
        %659 = vmatprep.subr.mxu0 0.0
        %660 = vmatpush1.msra.mxu0 0.0
        %661 = vmatprep.subr.mxu0 0.0
        %662 = vmatpush1.msra.mxu0 0.0
        %663 = vmatprep.subr.mxu0 0.0
        %664 = vmatpush1.msra.mxu0 0.0
        %665 = vmatprep.subr.mxu0 0.0
        %666 = vmatpush1.msra.mxu0 0.0
        %667 = vmatprep.subr.mxu0 0.0
        %668 = vmatpush1.msra.mxu0 0.0
        %669 = vmatprep.mubr.f32.mxu0 0.0
        %670 = vmatmul.mubr.f32.gmra.mrb[0].mxu0 %v525
        %v671 = vpop.f32.mrb[0].mxu0
        %v672 = vadd.f32 0.0, %v671
        %v673 = vpop.f32.mrb[0].mxu0
        %674 = vmatprep.mubr.f32.mxu0 0.0
        %675 = vmatmul.mubr.f32.gmra.mrb[0].mxu0 %v528
        %v676 = vpop.f32.mrb[0].mxu0
        %v677 = vadd.f32 0.0, %v676
        %v678 = vpop.f32.mrb[0].mxu0
        %679 = vdwg.mxu0
        %680 = vmatprep.subr.mxu0 0.0
        %681 = vmatpush1.msra.mxu0 %v435
        %682 = vmatprep.subr.mxu0 0.0
        %683 = vmatpush1.msra.mxu0 %v440
        %684 = vmatprep.subr.mxu0 0.0
        %685 = vmatpush1.msra.mxu0 0.0
        %686 = vmatprep.subr.mxu0 0.0
        %687 = vmatpush1.msra.mxu0 0.0
        %688 = vmatprep.subr.mxu0 0.0
        %689 = vmatpush1.msra.mxu0 0.0
        %690 = vmatprep.subr.mxu0 0.0
        %691 = vmatpush1.msra.mxu0 0.0
        %692 = vmatprep.subr.mxu0 0.0
        %693 = vmatpush1.msra.mxu0 0.0
        %694 = vmatprep.subr.mxu0 0.0
        %695 = vmatpush1.msra.mxu0 0.0
        %696 = vmatprep.subr.mxu0 0.0
        %697 = vmatpush1.msra.mxu0 0.0
        %698 = vmatprep.subr.mxu0 0.0
        %699 = vmatpush1.msra.mxu0 0.0
        %700 = vmatprep.subr.mxu0 0.0
        %701 = vmatpush1.msra.mxu0 0.0
        %702 = vmatprep.subr.mxu0 0.0
        %703 = vmatpush1.msra.mxu0 0.0
        %704 = vmatprep.subr.mxu0 0.0
        %705 = vmatpush1.msra.mxu0 0.0
        %706 = vmatprep.subr.mxu0 0.0
        %707 = vmatpush1.msra.mxu0 0.0
        %708 = vmatprep.subr.mxu0 0.0
        %709 = vmatpush1.msra.mxu0 0.0
        %710 = vmatprep.subr.mxu0 0.0
        %711 = vmatpush1.msra.mxu0 0.0
        %712 = vmatprep.subr.mxu0 0.0
        %713 = vmatpush1.msra.mxu0 0.0
        %714 = vmatprep.subr.mxu0 0.0
        %715 = vmatpush1.msra.mxu0 0.0
        %716 = vmatprep.subr.mxu0 0.0
        %717 = vmatpush1.msra.mxu0 0.0
        %718 = vmatprep.subr.mxu0 0.0
        %719 = vmatpush1.msra.mxu0 0.0
        %720 = vmatprep.subr.mxu0 0.0
        %721 = vmatpush1.msra.mxu0 0.0
        %722 = vmatprep.subr.mxu0 0.0
        %723 = vmatpush1.msra.mxu0 0.0
        %724 = vmatprep.subr.mxu0 0.0
        %725 = vmatpush1.msra.mxu0 0.0
        %726 = vmatprep.subr.mxu0 0.0
        %727 = vmatpush1.msra.mxu0 0.0
        %728 = vmatprep.subr.mxu0 0.0
        %729 = vmatpush1.msra.mxu0 0.0
        %730 = vmatprep.subr.mxu0 0.0
        %731 = vmatpush1.msra.mxu0 0.0
        %732 = vmatprep.subr.mxu0 0.0
        %733 = vmatpush1.msra.mxu0 0.0
        %734 = vmatprep.subr.mxu0 0.0
        %735 = vmatpush1.msra.mxu0 0.0
        %736 = vmatprep.subr.mxu0 0.0
        %737 = vmatpush1.msra.mxu0 0.0
        %738 = vmatprep.subr.mxu0 0.0
        %739 = vmatpush1.msra.mxu0 0.0
        %740 = vmatprep.subr.mxu0 0.0
        %741 = vmatpush1.msra.mxu0 0.0
        %742 = vmatprep.subr.mxu0 0.0
        %743 = vmatpush1.msra.mxu0 0.0
        %744 = vmatprep.mubr.f32.mxu0 0.0
        %745 = vmatmul.mubr.f32.gmra.mrb[0].mxu0 %v525
        %v746 = vpop.f32.mrb[0].mxu0
        %v747 = vadd.f32 0.0, %v746
        %v748 = vpop.f32.mrb[0].mxu0
        %749 = vmatprep.mubr.f32.mxu0 0.0
        %750 = vmatmul.mubr.f32.gmra.mrb[0].mxu0 %v528
        %v751 = vpop.f32.mrb[0].mxu0
        %v752 = vadd.f32 0.0, %v751
        %v753 = vpop.f32.mrb[0].mxu0
        %754 = vdwg.mxu0
        %755 = vmatprep.subr.mxu0 0.0
        %756 = vmatpush1.msra.mxu0 %v516
        %757 = vmatprep.subr.mxu0 0.0
        %758 = vmatpush1.msra.mxu0 %v521
        %759 = vmatprep.subr.mxu0 0.0
        %760 = vmatpush1.msra.mxu0 0.0
        %761 = vmatprep.subr.mxu0 0.0
        %762 = vmatpush1.msra.mxu0 0.0
        %763 = vmatprep.subr.mxu0 0.0
        %764 = vmatpush1.msra.mxu0 0.0
        %765 = vmatprep.subr.mxu0 0.0
        %766 = vmatpush1.msra.mxu0 0.0
        %767 = vmatprep.subr.mxu0 0.0
        %768 = vmatpush1.msra.mxu0 0.0
        %769 = vmatprep.subr.mxu0 0.0
        %770 = vmatpush1.msra.mxu0 0.0
        %771 = vmatprep.subr.mxu0 0.0
        %772 = vmatpush1.msra.mxu0 0.0
        %773 = vmatprep.subr.mxu0 0.0
        %774 = vmatpush1.msra.mxu0 0.0
        %775 = vmatprep.subr.mxu0 0.0
        %776 = vmatpush1.msra.mxu0 0.0
        %777 = vmatprep.subr.mxu0 0.0
        %778 = vmatpush1.msra.mxu0 0.0
        %779 = vmatprep.subr.mxu0 0.0
        %780 = vmatpush1.msra.mxu0 0.0
        %781 = vmatprep.subr.mxu0 0.0
        %782 = vmatpush1.msra.mxu0 0.0
        %783 = vmatprep.subr.mxu0 0.0
        %784 = vmatpush1.msra.mxu0 0.0
        %785 = vmatprep.subr.mxu0 0.0
        %786 = vmatpush1.msra.mxu0 0.0
        %787 = vmatprep.subr.mxu0 0.0
        %788 = vmatpush1.msra.mxu0 0.0
        %789 = vmatprep.subr.mxu0 0.0
        %790 = vmatpush1.msra.mxu0 0.0
        %791 = vmatprep.subr.mxu0 0.0
        %792 = vmatpush1.msra.mxu0 0.0
        %793 = vmatprep.subr.mxu0 0.0
        %794 = vmatpush1.msra.mxu0 0.0
        %795 = vmatprep.subr.mxu0 0.0
        %796 = vmatpush1.msra.mxu0 0.0
        %797 = vmatprep.subr.mxu0 0.0
        %798 = vmatpush1.msra.mxu0 0.0
        %799 = vmatprep.subr.mxu0 0.0
        %800 = vmatpush1.msra.mxu0 0.0
        %801 = vmatprep.subr.mxu0 0.0
        %802 = vmatpush1.msra.mxu0 0.0
        %803 = vmatprep.subr.mxu0 0.0
        %804 = vmatpush1.msra.mxu0 0.0
        %805 = vmatprep.subr.mxu0 0.0
        %806 = vmatpush1.msra.mxu0 0.0
        %807 = vmatprep.subr.mxu0 0.0
        %808 = vmatpush1.msra.mxu0 0.0
        %809 = vmatprep.subr.mxu0 0.0
        %810 = vmatpush1.msra.mxu0 0.0
        %811 = vmatprep.subr.mxu0 0.0
        %812 = vmatpush1.msra.mxu0 0.0
        %813 = vmatprep.subr.mxu0 0.0
        %814 = vmatpush1.msra.mxu0 0.0
        %815 = vmatprep.subr.mxu0 0.0
        %816 = vmatpush1.msra.mxu0 0.0
        %817 = vmatprep.subr.mxu0 0.0
        %818 = vmatpush1.msra.mxu0 0.0
        %819 = vmatprep.mubr.f32.mxu0 0.0
        %820 = vmatmul.mubr.f32.gmra.mrb[0].mxu0 %v525
        %v821 = vpop.f32.mrb[0].mxu0
        %v822 = vadd.f32 0.0, %v821
        %v823 = vpop.f32.mrb[0].mxu0
        %824 = vmatprep.mubr.f32.mxu0 0.0
        %825 = vmatmul.mubr.f32.gmra.mrb[0].mxu0 %v528
        %v826 = vpop.f32.mrb[0].mxu0
        %v827 = vadd.f32 0.0, %v826
        %v828 = vpop.f32.mrb[0].mxu0
        %829 = vdwg.mxu0
        %830 = vst.msk [vmem:[%s139] sm:$0xff] %vm193, %v597
        %831 = vst.msk [vmem:[%s139 + $0x8] sm:$0xff] %vm193, %v602
        %832 = vst.msk [vmem:[%s139 + $0x10] sm:$0xff] %vm193, %v672
        %833 = vst.msk [vmem:[%s139 + $0x18] sm:$0xff] %vm193, %v677
        %834 = vst.msk [vmem:[%s139 + $0x20] sm:$0xff] %vm193, %v747
        %835 = vst.msk [vmem:[%s139 + $0x28] sm:$0xff] %vm193, %v752
        %836 = vst.msk [vmem:[%s139 + $0x30] sm:$0xff] %vm193, %v822
        %837 = vst.msk [vmem:[%s139 + $0x38] sm:$0xff] %vm193, %v827
        %s838 = sand.u32 %s57, 1
        %s839 = scalar_lea.sflag [#allocation6], %s838
        %s840 = sand.u32 %s57, 1
        %s841 = smul.addr %s840, 64
        %s842 = scalar_lea.vmem [#allocation7], %s841
        // Predicated region
        $region29: #{tpu_custom_call.1} parent=23 // pred_check
          %p843 = pneg %p67
        $region30: #{tpu_custom_call.1} parent=23 // pred_check_branch
          %845 = sbr.rel (%p843) target = $region32
        $region31: #{tpu_custom_call.1} parent=23 // pred_region
          %s847 = ssub.s32 1024, 1024
          %848 = vsyncadd %s839, %s847
          %s849 = smul.addr %s23, 8
          %s850 = smul.addr %s849, 128
          %s851 = scalar_lea.hbm %s2, %s850
          %s852 = sshll.u32 %s842, 4
          %s853 = int_to_ptr.vmem [resolvable:$true] %s852
          %858 = dma.vmem_to_hbm [thread:$0]  %s853, 1024, %s851, %s839, 128, 128, 8
        $region32: #{tpu_custom_call.1} parent=23 // pred_fallthru
          _
      $region24: #{tpu_custom_call.1} parent=5 // pred_fallthru
        _
      %p859 = scmp.le.s32.totalorder 2, %s18
      // Predicated region
      $region33: #{tpu_custom_call.1} parent=5 // pred_check
        %p860 = pneg %p859
      $region34: #{tpu_custom_call.1} parent=5 // pred_check_branch
        %862 = sbr.rel (%p860) target = $region36
      $region35: #{tpu_custom_call.1} parent=5 // pred_region
        %s863 = ssub.s32 %s18, 2
        // Predicated region
        $region37: #{tpu_custom_call.1} parent=35 // pred_check
          %p864 = pneg %p73
        $region38: #{tpu_custom_call.1} parent=35 // pred_check_branch
          %866 = sbr.rel (%p864) target = $region40
        $region39: #{tpu_custom_call.1} parent=35 // pred_region
          %s867 = sand.u32 %s58, 1
          %s868 = scalar_lea.sflag [#allocation6], %s867
          %s869 = sand.u32 %s58, 1
          %s870 = smul.addr %s869, 64
          %s871 = scalar_lea.vmem [#allocation7], %s870
          %872 = dma.done %s868, 1024
        $region40: #{tpu_custom_call.1} parent=35 // pred_fallthru
          _
      $region36: #{tpu_custom_call.1} parent=5 // pred_fallthru
        _
    $region6: #{tpu_custom_call.1} parent=1 // loop_footer
      %s22 = sadd.s32 1, %s18
    $region7: #{tpu_custom_call.1} parent=1 // loop_footer_branch
      %17 = sbr.rel target = $region3
    $region8: #{tpu_custom_call.1} parent=1 // loop_exit
      _
    %873 = vsyncpa [#allocation5], 1
    %s874 = scalar_lea.sflag [#allocation5], 1
    %875 = vsyncpa %s874, 1
    %876 = vsyncpa [#allocation6], 1
    %s877 = scalar_lea.sflag [#allocation6], 1
    %878 = vsyncpa %s877, 1

</llo_original>
